<compile_context>
chip_gen: v7x
topology: tpu7x:2x2x1
jax: 0.10.0
libtpu: 0.0.40
codegen_flags: <defaults>
</compile_context>

<pallas_src>
import jax
import jax.numpy as jnp
from jax import lax
from jax.experimental import pallas as pl
from jax.experimental.pallas import tpu as pltpu

MARGIN = 0.2
USE_CAPS = True
USE_IMGS = True


def _hard_neg_kernel(imgs_ref, caps_ref,
                     colmax_ref, rowmax_ref, diag_ref,
                     rowmax_sc, diagrow_sc):
    i = pl.program_id(0)            # row tile   (parallel; megacore-shardable)
    j = pl.program_id(1)            # column tile (arbitrary; inner sweep)
    nj = pl.num_programs(1)
    tr = imgs_ref.shape[0]
    tc = caps_ref.shape[0]

    @pl.when(j == 0)
    def _init_row_tile():
        rowmax_sc[...] = jnp.full_like(rowmax_sc, -jnp.inf)
        diagrow_sc[...] = jnp.zeros_like(diagrow_sc)

    # (tr, tc) score tile on the MXU, f32 accumulation.
    s = lax.dot_general(
        imgs_ref[...], caps_ref[...],
        dimension_numbers=(((1,), (1,)), ((), ())),
        preferred_element_type=jnp.float32,
    )

    # Does this tile touch the global diagonal?  Only B/tr of the num_i*num_j
    # tiles do; everything else skips the iota/compare/select work entirely.
    intersects = (i * tr < (j + 1) * tc) & (j * tc < (i + 1) * tr)

    @pl.when(intersects)
    def _with_diag():
        # global row == global col  <=>  r - c == j*tc - i*tr
        r_idx = lax.broadcasted_iota(jnp.int32, (tr, tc), 0)
        c_idx = lax.broadcasted_iota(jnp.int32, (tr, tc), 1)
        is_diag = (r_idx - c_idx) == (j * tc - i * tr)
        masked = jnp.where(is_diag, -s, s)          # == scores - 2*diag(diag)
        colmax_ref[...] = jnp.max(
            masked, axis=0, keepdims=True).reshape(colmax_ref.shape)
        rowmax_sc[...] = jnp.maximum(
            rowmax_sc[...], jnp.max(masked, axis=1, keepdims=True))
        diagrow_sc[...] = diagrow_sc[...] + jnp.sum(
            jnp.where(is_diag, s, 0.0), axis=1, keepdims=True)

    @pl.when(jnp.logical_not(intersects))
    def _plain():
        colmax_ref[...] = jnp.max(
            s, axis=0, keepdims=True).reshape(colmax_ref.shape)
        rowmax_sc[...] = jnp.maximum(
            rowmax_sc[...], jnp.max(s, axis=1, keepdims=True))

    @pl.when(j == nj - 1)
    def _finalize_row_tile():
        rowmax_ref[...] = rowmax_sc[...].reshape(rowmax_ref.shape)
        diag_ref[...] = diagrow_sc[...].reshape(diag_ref.shape)


def _tpu_vmem_capacity_bytes():
    """Physical VMEM of the current part; conservative 64 MiB (v7x) fallback."""
    try:
        info = pltpu.get_tpu_info()
        cap = getattr(info, "vmem_capacity_bytes", None)
        if cap:
            return int(cap)
    except Exception:
        pass
    return 64 << 20


_TILE_CANDIDATES = (1024, 512, 256, 128, 64, 32, 16, 8)


def _largest_divisor_tile(n, upper):
    for t in _TILE_CANDIDATES:
        if t <= upper and n % t == 0:
            return t
    return n


def hard_negative_contrastive_loss(imgs, caps, *, margin=MARGIN,
                                   use_caps=USE_CAPS, use_imgs=USE_IMGS,
                                   row_tile=None, col_tile=None,
                                   compute_dtype=None,
                                   vmem_limit_bytes=None):
    assert imgs.ndim == 2 and caps.ndim == 2
    b, d = imgs.shape
    assert caps.shape == (b, d)

    # bf16 fast path: cast once in the wrapper so DMA/VMEM bytes are halved
    # and no per-grid-step cast runs in the kernel.  f32 default matches the
    # reference numerics exactly (MXU accumulates in f32 either way).
    if compute_dtype is not None:
        imgs = imgs.astype(compute_dtype)
        caps = caps.astype(compute_dtype)
    itemsize = imgs.dtype.itemsize

    vmem_cap = _tpu_vmem_capacity_bytes()

    # Column tile: keep caps fully VMEM-resident when its double-buffered copy
    # fits in ~60% of this generation's VMEM; otherwise tile, largest first.
    if col_tile is None:
        if 2 * b * d * itemsize <= int(vmem_cap * 0.60):
            tc = b
        else:
            tc = _largest_divisor_tile(b, 512)
    else:
        tc = _largest_divisor_tile(b, min(col_tile, b))

    # Row tile: 256 fills the 256x256 MXU (v6e/v7x); in the streamed regime go
    # to 512 to cut caps re-streaming (caps HBM traffic scales with B/row_tile).
    if row_tile is None:
        row_tile = 256 if tc == b else 512
    tr = _largest_divisor_tile(b, min(row_tile, b))

    def working_set(tr_, tc_):
        tiles = 2 * (tr_ + tc_) * d * itemsize      # double-buffered input panels
        outs = 2 * 4 * (tc_ + 2 * tr_)              # double-buffered output tiles
        scratch = 2 * 4 * tr_
        return tiles + outs + scratch + (1 << 20)

    # Shrink the row tile if the working set would blow the per-gen budget.
    while (tr >= 16 and (tr // 2) % 8 == 0 and b % (tr // 2) == 0
           and working_set(tr, tc) > int(vmem_cap * 0.70)):
        tr //= 2

    assert b % tr == 0 and b % tc == 0, (b, tr, tc)
    num_i = b // tr
    num_j = b // tc

    if vmem_limit_bytes is None:
        # Always set an explicit, generation-capped limit: v5e's 16 MiB default
        # is too small for mid-size shapes, and 0.85x physical never exceeds
        # v7x's 64 MiB.
        vmem_limit_bytes = min(int(vmem_cap * 0.85),
                               max(32 << 20, int(working_set(tr, tc) * 1.25)))

    out_shape = (
        jax.ShapeDtypeStruct((num_i, num_j, 1, tc), jnp.float32),  # per-tile col max
        jax.ShapeDtypeStruct((num_i, tr, 1), jnp.float32),         # per-row max
        jax.ShapeDtypeStruct((num_i, tr, 1), jnp.float32),         # per-row diag
    )

    colmax_p, rowmax_p, diag_p = pl.pallas_call(
        _hard_neg_kernel,
        out_shape=out_shape,
        grid_spec=pltpu.PrefetchScalarGridSpec(
            num_scalar_prefetch=0,
            grid=(num_i, num_j),
            in_specs=[
                pl.BlockSpec((tr, d), lambda i, j: (i, 0)),   # imgs row panel
                pl.BlockSpec((tc, d), lambda i, j: (j, 0)),   # caps column panel
            ],
            out_specs=(
                pl.BlockSpec((1, 1, 1, tc), lambda i, j: (i, j, 0, 0)),
                pl.BlockSpec((1, tr, 1), lambda i, j: (i, 0, 0)),
                pl.BlockSpec((1, tr, 1), lambda i, j: (i, 0, 0)),
            ),
            scratch_shapes=[
                pltpu.VMEM((tr, 1), jnp.float32),   # running row max across j
                pltpu.VMEM((tr, 1), jnp.float32),   # diag(rows) accumulated across j
            ],
        ),
        compiler_params=pltpu.CompilerParams(
            dimension_semantics=("parallel", "arbitrary"),
            vmem_limit_bytes=vmem_limit_bytes),
    )(imgs, caps)

    # Tiny XLA epilogue over O(B * B/tr) partials (all O(B^2 D) work stays in
    # the kernel): reduce the per-tile column maxima across row tiles, apply
    # the hinge, average.
    diag = diag_p.reshape(b)
    max_i = rowmax_p.reshape(b)
    max_c = jnp.max(colmax_p.reshape(num_i, b), axis=0)
    neg_cap = jnp.maximum(margin - diag + max_c, 0.0)
    neg_img = jnp.maximum(margin - diag + max_i, 0.0)
    loss = jnp.float32(0.0)
    if use_caps:
        loss = loss + jnp.mean(neg_cap)
    if use_imgs:
        loss = loss + jnp.mean(neg_img)
    return loss


def _reference_loss(imgs, caps, margin=MARGIN, use_caps=USE_CAPS,
                    use_imgs=USE_IMGS):
    scores = imgs @ caps.T
    diag = jnp.diag(scores)
    masked = scores - 2.0 * jnp.diag(diag)
    max_c = jnp.max(masked, axis=0)                     # top-1 per column
    max_i = jnp.max(masked, axis=1)                     # top-1 per row
    neg_cap = jnp.maximum(margin - diag + max_c, 0.0)
    neg_img = jnp.maximum(margin - diag + max_i, 0.0)
    loss = 0.0
    if use_caps:
        loss = loss + jnp.mean(neg_cap)
    if use_imgs:
        loss = loss + jnp.mean(neg_img)
    return loss


if __name__ == "__main__":
    key = jax.random.PRNGKey(0)
    k1, k2, k3, k4 = jax.random.split(key, 4)

    # Small single-tile case (matches the module's 2-D branch).
    B0, D0 = 16, 32
    imgs0 = jax.random.normal(k1, (B0, D0), dtype=jnp.float32)
    caps0 = jax.random.normal(k2, (B0, D0), dtype=jnp.float32)
    out0 = jax.block_until_ready(hard_negative_contrastive_loss(imgs0, caps0))
    ref0 = jax.block_until_ready(_reference_loss(imgs0, caps0))
    assert jnp.allclose(out0, ref0, atol=1e-5, rtol=1e-5), (out0, ref0)

    # Multi-tile case exercising the 2-D grid and the diag-gated branch.
    B1, D1 = 256, 128
    imgs1 = jax.random.normal(k3, (B1, D1), dtype=jnp.float32)
    caps1 = jax.random.normal(k4, (B1, D1), dtype=jnp.float32)
    out1 = jax.block_until_ready(hard_negative_contrastive_loss(
        imgs1, caps1, row_tile=128, col_tile=128))
    ref1 = jax.block_until_ready(_reference_loss(imgs1, caps1))
    assert jnp.allclose(out1, ref1, atol=1e-4, rtol=1e-4), (out1, ref1)

    # Default auto-tiled (resident-caps) path on the same data.
    out1b = jax.block_until_ready(hard_negative_contrastive_loss(imgs1, caps1))
    assert jnp.allclose(out1b, ref1, atol=1e-4, rtol=1e-4), (out1b, ref1)

    # bf16 MXU fast path (f32 accumulation) — looser tolerance.
    out2 = jax.block_until_ready(hard_negative_contrastive_loss(
        imgs1, caps1, compute_dtype=jnp.bfloat16))
    assert jnp.allclose(out2, ref1, atol=5e-2, rtol=5e-2), (out2, ref1)

    print("KERNEL_OK")
</pallas_src>

<mosaic_0001>
module attributes {stable_mosaic.version = 11 : i64} {
  func.func @_hard_neg_kernel(%arg0: i32, %arg1: i32, %arg2: memref<16x32xf32, #tpu.memory_space<vmem>>, %arg3: memref<16x32xf32, #tpu.memory_space<vmem>>, %arg4: memref<1x1x1x16xf32, #tpu.memory_space<vmem>>, %arg5: memref<1x16x1xf32, #tpu.memory_space<vmem>>, %arg6: memref<1x16x1xf32, #tpu.memory_space<vmem>>, %arg7: memref<16x1xf32, #tpu.memory_space<vmem>>, %arg8: memref<16x1xf32, #tpu.memory_space<vmem>>) attributes {dimension_semantics = [#tpu.dimension_semantics<parallel>, #tpu.dimension_semantics<arbitrary>], iteration_bounds = array<i64: 1, 1>, scalar_prefetch = 0 : i64, scratch_operands = 2 : i64, tpu.core_type = #tpu.core_type<tc>, window_params = [{transform_indices = @transform_0, window_bounds = array<i64: 16, 32>}, {transform_indices = @transform_1, window_bounds = array<i64: 16, 32>}, {transform_indices = @transform_2, window_bounds = array<i64: 1, 1, 1, 16>}, {transform_indices = @transform_3, window_bounds = array<i64: 1, 16, 1>}, {transform_indices = @transform_4, window_bounds = array<i64: 1, 16, 1>}]} {
    %c0_i32 = arith.constant 0 : i32
    %0 = arith.cmpi eq, %arg1, %c0_i32 : i32
    %1 = arith.extui %0 : i1 to i32
    %c0_i32_0 = arith.constant 0 : i32
    %2 = arith.cmpi ne, %1, %c0_i32_0 : i32
    scf.if %2 {
      %cst_12 = arith.constant 0xFF800000 : f32
      %23 = vector.broadcast %cst_12 : f32 to vector<16x1xf32>
      %c0_13 = arith.constant 0 : index
      %c0_14 = arith.constant 0 : index
      %24 = vector.load %arg7[%c0_13, %c0_14] : memref<16x1xf32, #tpu.memory_space<vmem>>, vector<16x1xf32>
      tpu.vector_store %arg7[%c0_13, %c0_14], %23 {strides = array<i32>} : memref<16x1xf32, #tpu.memory_space<vmem>>, vector<16x1xf32>,
      %cst_15 = arith.constant 0.000000e+00 : f32
      %25 = vector.broadcast %cst_15 : f32 to vector<16x1xf32>
      %c0_16 = arith.constant 0 : index
      %c0_17 = arith.constant 0 : index
      %26 = vector.load %arg8[%c0_16, %c0_17] : memref<16x1xf32, #tpu.memory_space<vmem>>, vector<16x1xf32>
      tpu.vector_store %arg8[%c0_16, %c0_17], %25 {strides = array<i32>} : memref<16x1xf32, #tpu.memory_space<vmem>>, vector<16x1xf32>,
    } else {
    }
    %c0 = arith.constant 0 : index
    %c0_1 = arith.constant 0 : index
    %3 = vector.load %arg2[%c0, %c0_1] : memref<16x32xf32, #tpu.memory_space<vmem>>, vector<16x32xf32>
    %c0_2 = arith.constant 0 : index
    %c0_3 = arith.constant 0 : index
    %4 = vector.load %arg3[%c0_2, %c0_3] : memref<16x32xf32, #tpu.memory_space<vmem>>, vector<16x32xf32>
    %cst = arith.constant dense<0.000000e+00> : vector<16x16xf32>
    %5 = tpu.matmul %3, %4, %cst {dimension_numbers = #tpu.dot_dimension_numbers<[1], [1], [0], [0], [0, 0, 1, 0], [], []>} : vector<16x32xf32>, vector<16x32xf32>, vector<16x16xf32> -> vector<16x16xf32>
    %c16_i32 = arith.constant 16 : i32
    %6 = arith.muli %arg0, %c16_i32 : i32
    %c1_i32 = arith.constant 1 : i32
    %7 = arith.addi %arg1, %c1_i32 : i32
    %c16_i32_4 = arith.constant 16 : i32
    %8 = arith.muli %7, %c16_i32_4 : i32
    %9 = arith.cmpi slt, %6, %8 : i32
    %c16_i32_5 = arith.constant 16 : i32
    %10 = arith.muli %arg1, %c16_i32_5 : i32
    %c1_i32_6 = arith.constant 1 : i32
    %11 = arith.addi %arg0, %c1_i32_6 : i32
    %c16_i32_7 = arith.constant 16 : i32
    %12 = arith.muli %11, %c16_i32_7 : i32
    %13 = arith.cmpi slt, %10, %12 : i32
    %14 = arith.andi %9, %13 : i1
    %15 = arith.extui %14 : i1 to i32
    %c0_i32_8 = arith.constant 0 : i32
    %16 = arith.cmpi ne, %15, %c0_i32_8 : i32
    scf.if %16 {
      %23 = tpu.iota {dimensions = array<i32: 0>} : vector<16x16xi32>
      %24 = tpu.iota {dimensions = array<i32: 1>} : vector<16x16xi32>
      %25 = arith.subi %23, %24 : vector<16x16xi32>
      %c16_i32_12 = arith.constant 16 : i32
      %26 = arith.muli %arg1, %c16_i32_12 : i32
      %c16_i32_13 = arith.constant 16 : i32
      %27 = arith.muli %arg0, %c16_i32_13 : i32
      %28 = arith.subi %26, %27 : i32
      %29 = vector.broadcast %28 : i32 to vector<16x16xi32>
      %30 = arith.cmpi eq, %25, %29 : vector<16x16xi32>
      %cst_14 = arith.constant 0.000000e+00 : f32
      %31 = vector.broadcast %cst_14 : f32 to vector<16x16xf32>
      %32 = arith.subf %31, %5 : vector<16x16xf32>
      %33 = arith.select %30, %32, %5 : vector<16x16xi1>, vector<16x16xf32>
      %cst_15 = arith.constant dense<0xFF800000> : vector<16xf32>
      %34 = vector.multi_reduction <maximumf>, %33, %cst_15 [0] : vector<16x16xf32> to vector<16xf32>
      %35 = vector.shape_cast %34 : vector<16xf32> to vector<1x16xf32>
      %36 = vector.shape_cast %35 : vector<1x16xf32> to vector<1x1x1x16xf32>
      %c0_16 = arith.constant 0 : index
      %c0_17 = arith.constant 0 : index
      %c0_18 = arith.constant 0 : index
      %c0_19 = arith.constant 0 : index
      %37 = vector.load %arg4[%c0_16, %c0_17, %c0_18, %c0_19] : memref<1x1x1x16xf32, #tpu.memory_space<vmem>>, vector<1x1x1x16xf32>
      tpu.vector_store %arg4[%c0_16, %c0_17, %c0_18, %c0_19], %36 {strides = array<i32>} : memref<1x1x1x16xf32, #tpu.memory_space<vmem>>, vector<1x1x1x16xf32>,
      %c0_20 = arith.constant 0 : index
      %c0_21 = arith.constant 0 : index
      %38 = vector.load %arg7[%c0_20, %c0_21] : memref<16x1xf32, #tpu.memory_space<vmem>>, vector<16x1xf32>
      %cst_22 = arith.constant dense<0xFF800000> : vector<16xf32>
      %39 = vector.multi_reduction <maximumf>, %33, %cst_22 [1] : vector<16x16xf32> to vector<16xf32>
      %40 = vector.shape_cast %39 : vector<16xf32> to vector<16x1xf32>
      %41 = arith.maximumf %38, %40 : vector<16x1xf32>
      %c0_23 = arith.constant 0 : index
      %c0_24 = arith.constant 0 : index
      %42 = vector.load %arg7[%c0_23, %c0_24] : memref<16x1xf32, #tpu.memory_space<vmem>>, vector<16x1xf32>
      tpu.vector_store %arg7[%c0_23, %c0_24], %41 {strides = array<i32>} : memref<16x1xf32, #tpu.memory_space<vmem>>, vector<16x1xf32>,
      %c0_25 = arith.constant 0 : index
      %c0_26 = arith.constant 0 : index
      %43 = vector.load %arg8[%c0_25, %c0_26] : memref<16x1xf32, #tpu.memory_space<vmem>>, vector<16x1xf32>
      %cst_27 = arith.constant 0.000000e+00 : f32
      %44 = vector.broadcast %cst_27 : f32 to vector<16x16xf32>
      %45 = arith.select %30, %5, %44 : vector<16x16xi1>, vector<16x16xf32>
      %cst_28 = arith.constant dense<0.000000e+00> : vector<16xf32>
      %46 = vector.multi_reduction <add>, %45, %cst_28 [1] : vector<16x16xf32> to vector<16xf32>
      %47 = vector.shape_cast %46 : vector<16xf32> to vector<16x1xf32>
      %48 = arith.addf %43, %47 : vector<16x1xf32>
      %c0_29 = arith.constant 0 : index
      %c0_30 = arith.constant 0 : index
      %49 = vector.load %arg8[%c0_29, %c0_30] : memref<16x1xf32, #tpu.memory_space<vmem>>, vector<16x1xf32>
      tpu.vector_store %arg8[%c0_29, %c0_30], %48 {strides = array<i32>} : memref<16x1xf32, #tpu.memory_space<vmem>>, vector<16x1xf32>,
    } else {
    }
    %true = arith.constant true
    %17 = arith.xori %14, %true : i1
    %18 = arith.extui %17 : i1 to i32
    %c0_i32_9 = arith.constant 0 : i32
    %19 = arith.cmpi ne, %18, %c0_i32_9 : i32
    scf.if %19 {
      %cst_12 = arith.constant dense<0xFF800000> : vector<16xf32>
      %23 = vector.multi_reduction <maximumf>, %5, %cst_12 [0] : vector<16x16xf32> to vector<16xf32>
      %24 = vector.shape_cast %23 : vector<16xf32> to vector<1x16xf32>
      %25 = vector.shape_cast %24 : vector<1x16xf32> to vector<1x1x1x16xf32>
      %c0_13 = arith.constant 0 : index
      %c0_14 = arith.constant 0 : index
      %c0_15 = arith.constant 0 : index
      %c0_16 = arith.constant 0 : index
      %26 = vector.load %arg4[%c0_13, %c0_14, %c0_15, %c0_16] : memref<1x1x1x16xf32, #tpu.memory_space<vmem>>, vector<1x1x1x16xf32>
      tpu.vector_store %arg4[%c0_13, %c0_14, %c0_15, %c0_16], %25 {strides = array<i32>} : memref<1x1x1x16xf32, #tpu.memory_space<vmem>>, vector<1x1x1x16xf32>,
      %c0_17 = arith.constant 0 : index
      %c0_18 = arith.constant 0 : index
      %27 = vector.load %arg7[%c0_17, %c0_18] : memref<16x1xf32, #tpu.memory_space<vmem>>, vector<16x1xf32>
      %cst_19 = arith.constant dense<0xFF800000> : vector<16xf32>
      %28 = vector.multi_reduction <maximumf>, %5, %cst_19 [1] : vector<16x16xf32> to vector<16xf32>
      %29 = vector.shape_cast %28 : vector<16xf32> to vector<16x1xf32>
      %30 = arith.maximumf %27, %29 : vector<16x1xf32>
      %c0_20 = arith.constant 0 : index
      %c0_21 = arith.constant 0 : index
      %31 = vector.load %arg7[%c0_20, %c0_21] : memref<16x1xf32, #tpu.memory_space<vmem>>, vector<16x1xf32>
      tpu.vector_store %arg7[%c0_20, %c0_21], %30 {strides = array<i32>} : memref<16x1xf32, #tpu.memory_space<vmem>>, vector<16x1xf32>,
    } else {
    }
    %c0_i32_10 = arith.constant 0 : i32
    %20 = arith.cmpi eq, %arg1, %c0_i32_10 : i32
    %21 = arith.extui %20 : i1 to i32
    %c0_i32_11 = arith.constant 0 : i32
    %22 = arith.cmpi ne, %21, %c0_i32_11 : i32
    scf.if %22 {
      %c0_12 = arith.constant 0 : index
      %c0_13 = arith.constant 0 : index
      %23 = vector.load %arg7[%c0_12, %c0_13] : memref<16x1xf32, #tpu.memory_space<vmem>>, vector<16x1xf32>
      %24 = vector.shape_cast %23 : vector<16x1xf32> to vector<1x16x1xf32>
      %c0_14 = arith.constant 0 : index
      %c0_15 = arith.constant 0 : index
      %c0_16 = arith.constant 0 : index
      %25 = vector.load %arg5[%c0_14, %c0_15, %c0_16] : memref<1x16x1xf32, #tpu.memory_space<vmem>>, vector<1x16x1xf32>
      tpu.vector_store %arg5[%c0_14, %c0_15, %c0_16], %24 {strides = array<i32>} : memref<1x16x1xf32, #tpu.memory_space<vmem>>, vector<1x16x1xf32>,
      %c0_17 = arith.constant 0 : index
      %c0_18 = arith.constant 0 : index
      %26 = vector.load %arg8[%c0_17, %c0_18] : memref<16x1xf32, #tpu.memory_space<vmem>>, vector<16x1xf32>
      %27 = vector.shape_cast %26 : vector<16x1xf32> to vector<1x16x1xf32>
      %c0_19 = arith.constant 0 : index
      %c0_20 = arith.constant 0 : index
      %c0_21 = arith.constant 0 : index
      %28 = vector.load %arg6[%c0_19, %c0_20, %c0_21] : memref<1x16x1xf32, #tpu.memory_space<vmem>>, vector<1x16x1xf32>
      tpu.vector_store %arg6[%c0_19, %c0_20, %c0_21], %27 {strides = array<i32>} : memref<1x16x1xf32, #tpu.memory_space<vmem>>, vector<1x16x1xf32>,
    } else {
    }
    return
  }
  func.func @transform_0(%arg0: i32, %arg1: i32) -> (i32, i32) {
    %c0_i32 = arith.constant 0 : i32
    %c0_i32_0 = arith.constant 0 : i32
    return %arg0, %c0_i32 : i32, i32
  }
  func.func @transform_1(%arg0: i32, %arg1: i32) -> (i32, i32) {
    %c0_i32 = arith.constant 0 : i32
    %c0_i32_0 = arith.constant 0 : i32
    return %arg1, %c0_i32 : i32, i32
  }
  func.func @transform_2(%arg0: i32, %arg1: i32) -> (i32, i32, i32, i32) {
    %c0_i32 = arith.constant 0 : i32
    %c0_i32_0 = arith.constant 0 : i32
    %c0_i32_1 = arith.constant 0 : i32
    return %arg0, %arg1, %c0_i32, %c0_i32_0 : i32, i32, i32, i32
  }
  func.func @transform_3(%arg0: i32, %arg1: i32) -> (i32, i32, i32) {
    %c0_i32 = arith.constant 0 : i32
    %c0_i32_0 = arith.constant 0 : i32
    %c0_i32_1 = arith.constant 0 : i32
    return %arg0, %c0_i32, %c0_i32_0 : i32, i32, i32
  }
  func.func @transform_4(%arg0: i32, %arg1: i32) -> (i32, i32, i32) {
    %c0_i32 = arith.constant 0 : i32
    %c0_i32_0 = arith.constant 0 : i32
    %c0_i32_1 = arith.constant 0 : i32
    return %arg0, %c0_i32, %c0_i32_0 : i32, i32, i32
  }
}

</mosaic_0001>

<llo_original>
// kernel: tpu_custom_call.1
$region0: #{tpu_custom_call.1}
  #allocation0 [shape = 'u32[]', space=smem, size = 0x4, offset = 0x4, fixed_abs, tag = 'smem constant byte address 0x4 - core index']
  #allocation1 [shape = 'u32[144,128]{1,0:T(1,128)}', space=vmem, size = 0x12000, scoped, tag = 'internal scratch']
  #allocation2 [shape = 'f32[16,1]{1,0:T(8,128)}', space=vmem, size = 0x2000, scoped, tag = 'scratch operand']
  #allocation3 [shape = 'f32[16,1]{1,0:T(8,128)}', space=vmem, size = 0x2000, scoped, tag = 'scratch operand']
  %s0 = inlined_call_operand.hbm [shape: f32[16,32], index: 0, kind: input, shape index: {}]
  %s1 = inlined_call_operand.hbm [shape: f32[16,32], index: 1, kind: input, shape index: {}]
  %s2 = inlined_call_operand.hbm [shape: f32[1,1,1,16], index: 2, kind: output, shape index: {0}]
  %s3 = inlined_call_operand.vmem [shape: f32[1,16,1], index: 3, kind: output, shape index: {1}]
  %s4 = inlined_call_operand.vmem [shape: f32[1,16,1], index: 4, kind: output, shape index: {2}]
  %5 = xla_tuple %s2, %s3, %s4
  %s6 = sld [smem:[#allocation0]]
  $region58: #{tpu_custom_call.1} parent=0
    _
  %s8 = ssub.s32 1, %s6
  %s9 = scalar_select 0, %s8, %s6
  $region1: #{tpu_custom_call.1} parent=0
    #allocation4 [shape = 'u8[8192]{0}', space=vmem, size = 0x2000, scoped, tag = 'input window, operand 0, single buffered']
    #allocation5 [shape = 's32[1]{0}', space=sflag, size = 0x4, scoped, tag = 'scoped memory for tpu_custom_call.1']
    #allocation6 [shape = 's32[1]{0}', space=sflag, size = 0x4, scoped, tag = 'scoped memory for tpu_custom_call.1']
    #allocation7 [shape = 'u8[8192]{0}', space=vmem, size = 0x2000, scoped, tag = 'input window, operand 1, single buffered']
    #allocation8 [shape = 's32[1]{0}', space=sflag, size = 0x4, scoped, tag = 'scoped memory for tpu_custom_call.1']
    #allocation9 [shape = 'u8[512]{0}', space=vmem, size = 0x400, scoped, tag = 'output window, operand 0, single buffered']
    %10 = vsyncpa [#allocation5], 0
    %11 = vsyncpa [#allocation8], 0
    %12 = vsyncpa [#allocation6], 0
    // Predicated region
    $region2: #{tpu_custom_call.1} parent=1 // pred_check
      _
    $region3: #{tpu_custom_call.1} parent=1 // pred_check_branch
      %14 = sbr.rel (0) target = $region5
    $region4: #{tpu_custom_call.1} parent=1 // pred_region
      %s16 = ssub.s32 256, 256
      %17 = vsyncadd [#allocation5], %s16
      %s18 = sshll.u32 [#allocation4], 4
      %s19 = int_to_ptr.vmem [resolvable:$true] %s18
      %24 = dma.hbm_to_vmem [thread:$0]  %s0, 256, %s19, [#allocation5], 128, 128, 8
    $region5: #{tpu_custom_call.1} parent=1 // pred_fallthru
      _
    // Predicated region
    $region6: #{tpu_custom_call.1} parent=1 // pred_check
      _
    $region7: #{tpu_custom_call.1} parent=1 // pred_check_branch
      %26 = sbr.rel (0) target = $region9
    $region8: #{tpu_custom_call.1} parent=1 // pred_region
      %s28 = ssub.s32 256, 256
      %29 = vsyncadd [#allocation8], %s28
      %s30 = sshll.u32 [#allocation7], 4
      %s31 = int_to_ptr.vmem [resolvable:$true] %s30
      %36 = dma.hbm_to_vmem [thread:$0]  %s1, 256, %s31, [#allocation8], 128, 128, 8
    $region9: #{tpu_custom_call.1} parent=1 // pred_fallthru
      _
    // Predicated region
    $region10: #{tpu_custom_call.1} parent=1 // pred_check
      _
    $region11: #{tpu_custom_call.1} parent=1 // pred_check_branch
      %38 = sbr.rel (0) target = $region13
    $region12: #{tpu_custom_call.1} parent=1 // pred_region
      %39 = dma.done [#allocation5], 256
    $region13: #{tpu_custom_call.1} parent=1 // pred_fallthru
      _
    // Predicated region
    $region14: #{tpu_custom_call.1} parent=1 // pred_check
      _
    $region15: #{tpu_custom_call.1} parent=1 // pred_check_branch
      %41 = sbr.rel (0) target = $region17
    $region16: #{tpu_custom_call.1} parent=1 // pred_region
      %42 = dma.done [#allocation8], 256
    $region17: #{tpu_custom_call.1} parent=1 // pred_fallthru
      _
    %p43 = scmp.eq.s32.totalorder 0, 0
    // Predicated region
    $region18: #{tpu_custom_call.1} parent=1 // pred_check
      %p44 = pneg %p43
    $region19: #{tpu_custom_call.1} parent=1 // pred_check_branch
      %46 = sbr.rel (%p44) target = $region21
    $region20: #{tpu_custom_call.1} parent=1 // pred_region
      %vm47 = vcmask 7168
      %48 = vst.msk [vmem:[#allocation2] sm:$0xff] %vm47, -inf
      %49 = vst.msk [vmem:[#allocation2 + $0x8] sm:$0xff] %vm47, -inf
      %50 = vst.msk [vmem:[#allocation3] sm:$0xff] %vm47, 0.0
      %51 = vst.msk [vmem:[#allocation3 + $0x8] sm:$0xff] %vm47, 0.0
    $region21: #{tpu_custom_call.1} parent=1 // pred_fallthru
      _
    %v52 = vld [vmem:[#allocation4] sm:$0xff]
    %v53 = vld [vmem:[#allocation4 + $0x8] sm:$0xff]
    %v54 = vld [vmem:[#allocation7] sm:$0xff]
    %v55 = vld [vmem:[#allocation7 + $0x8] sm:$0xff]
    %vm56 = vcmask 261120
    %v58 = vsel %vm56, %v52, 0
    %v61 = vsel %vm56, %v53, 0
    %v64 = vsel %vm56, %v54, 0
    %v67 = vsel %vm56, %v55, 0
    %69 = vmatprep.subr.mxu0 0.0
    %70 = vmatpush1.xpose.msra.mxu0 %v64
    %71 = vmatprep.subr.mxu0 0.0
    %72 = vmatpush1.xpose.msra.mxu0 %v67
    %73 = vmatprep.subr.mxu0 0.0
    %74 = vmatpush1.xpose.msra.mxu0 0.0
    %75 = vmatprep.subr.mxu0 0.0
    %76 = vmatpush1.xpose.msra.mxu0 0.0
    %77 = vmatprep.subr.mxu0 0.0
    %78 = vmatpush1.xpose.msra.mxu0 0.0
    %79 = vmatprep.subr.mxu0 0.0
    %80 = vmatpush1.xpose.msra.mxu0 0.0
    %81 = vmatprep.subr.mxu0 0.0
    %82 = vmatpush1.xpose.msra.mxu0 0.0
    %83 = vmatprep.subr.mxu0 0.0
    %84 = vmatpush1.xpose.msra.mxu0 0.0
    %85 = vmatprep.subr.mxu0 0.0
    %86 = vmatpush1.xpose.msra.mxu0 0.0
    %87 = vmatprep.subr.mxu0 0.0
    %88 = vmatpush1.xpose.msra.mxu0 0.0
    %89 = vmatprep.subr.mxu0 0.0
    %90 = vmatpush1.xpose.msra.mxu0 0.0
    %91 = vmatprep.subr.mxu0 0.0
    %92 = vmatpush1.xpose.msra.mxu0 0.0
    %93 = vmatprep.subr.mxu0 0.0
    %94 = vmatpush1.xpose.msra.mxu0 0.0
    %95 = vmatprep.subr.mxu0 0.0
    %96 = vmatpush1.xpose.msra.mxu0 0.0
    %97 = vmatprep.subr.mxu0 0.0
    %98 = vmatpush1.xpose.msra.mxu0 0.0
    %99 = vmatprep.subr.mxu0 0.0
    %100 = vmatpush1.xpose.msra.mxu0 0.0
    %101 = vmatprep.subr.mxu0 0.0
    %102 = vmatpush1.xpose.msra.mxu0 0.0
    %103 = vmatprep.subr.mxu0 0.0
    %104 = vmatpush1.xpose.msra.mxu0 0.0
    %105 = vmatprep.subr.mxu0 0.0
    %106 = vmatpush1.xpose.msra.mxu0 0.0
    %107 = vmatprep.subr.mxu0 0.0
    %108 = vmatpush1.xpose.msra.mxu0 0.0
    %109 = vmatprep.subr.mxu0 0.0
    %110 = vmatpush1.xpose.msra.mxu0 0.0
    %111 = vmatprep.subr.mxu0 0.0
    %112 = vmatpush1.xpose.msra.mxu0 0.0
    %113 = vmatprep.subr.mxu0 0.0
    %114 = vmatpush1.xpose.msra.mxu0 0.0
    %115 = vmatprep.subr.mxu0 0.0
    %116 = vmatpush1.xpose.msra.mxu0 0.0
    %117 = vmatprep.subr.mxu0 0.0
    %118 = vmatpush1.xpose.msra.mxu0 0.0
    %119 = vmatprep.subr.mxu0 0.0
    %120 = vmatpush1.xpose.msra.mxu0 0.0
    %121 = vmatprep.subr.mxu0 0.0
    %122 = vmatpush1.xpose.msra.mxu0 0.0
    %123 = vmatprep.subr.mxu0 0.0
    %124 = vmatpush1.xpose.msra.mxu0 0.0
    %125 = vmatprep.subr.mxu0 0.0
    %126 = vmatpush1.xpose.msra.mxu0 0.0
    %127 = vmatprep.subr.mxu0 0.0
    %128 = vmatpush1.xpose.msra.mxu0 0.0
    %129 = vmatprep.subr.mxu0 0.0
    %130 = vmatpush1.xpose.msra.mxu0 0.0
    %131 = vmatprep.subr.mxu0 0.0
    %132 = vmatpush1.xpose.msra.mxu0 0.0
    %133 = vmatprep.mubr.f32.mxu0 0.0
    %134 = vmatmul.mubr.f32.gmra.mrb[0].mxu0 %v58
    %v135 = vpop.f32.mrb[0].mxu0
    %v136 = vadd.f32 0.0, %v135
    %v137 = vpop.f32.mrb[0].mxu0
    %138 = vmatprep.mubr.f32.mxu0 0.0
    %139 = vmatmul.mubr.f32.gmra.mrb[0].mxu0 %v61
    %v140 = vpop.f32.mrb[0].mxu0
    %v141 = vadd.f32 0.0, %v140
    %v142 = vpop.f32.mrb[0].mxu0
    %143 = vdwg.mxu0
    %s144 = smul.u32 0, 16
    %s145 = sadd.s32 0, 1
    %s146 = smul.u32 %s145, 16
    %p147 = scmp.lt.s32.totalorder %s144, %s146
    %s148 = smul.u32 0, 16
    %s149 = sadd.s32 0, 1
    %s150 = smul.u32 %s149, 16
    %p151 = scmp.lt.s32.totalorder %s148, %s150
    %p152 = pnand %p147, %p151
    %p153 = pneg %p152
    // Predicated region
    $region22: #{tpu_custom_call.1} parent=1 // pred_check
      _
    $region23: #{tpu_custom_call.1} parent=1 // pred_check_branch
      %155 = sbr.rel (%p152) target = $region25
    $region24: #{tpu_custom_call.1} parent=1 // pred_region
      %v156 = vlaneseq
      %v157 = vshrl.u32 %v156, 7
      %v158 = vadd.s32 %v157, 8
      %v159 = vlaneseq
      %v160 = vand.u32 %v159, 127
      %v161 = vsub.s32 %v157, %v160
      %v162 = vsub.s32 %v158, %v160
      %s163 = ssub.s32 %s148, %s144
      %v164 = vstv %s163
      %vm165 = vcmp.eq.s32.totalorder %v161, %v164
      %vm166 = vcmp.eq.s32.totalorder %v162, %v164
      %v167 = vsub.f32 0.0, %v136
      %v168 = vsub.f32 0.0, %v141
      %v169 = vsel %vm165, %v167, %v136
      %v170 = vsel %vm166, %v168, %v141
      %vm171 = vcmask 130048
      %v172 = vsel %vm171, %v169, -inf
      %v173 = vsel %vm171, %v170, -inf
      %v174 = vmax.f32 %v172, %v173
      %v175 = vrot.slane %v174, 4
      %v176 = vmax.f32 %v174, %v175
      %v177 = vrot.slane %v176, 2
      %v178 = vmax.f32 %v176, %v177
      %v179 = vrot.slane %v178, 1
      %v180 = vmax.f32 %v178, %v179
      %vm181 = vcmask 122880
      %182 = vst.msk [vmem:[#allocation9] sm:$0x1] %vm181, %v180
      %v183 = vld [vmem:[#allocation2] sm:$0xff]
      %v184 = vld [vmem:[#allocation2 + $0x8] sm:$0xff]
      %185 = vmax.xlane.f32.xlu0 %v172
      %v186 = vpop.xlane.xlu0 %185
      %187 = vmax.xlane.f32.xlu0 %v173
      %v188 = vpop.xlane.xlu0 %187
      %v189 = vmax.f32 %v183, %v186
      %v190 = vmax.f32 %v184, %v188
      %vm191 = vcmask 7168
      %192 = vst.msk [vmem:[#allocation2] sm:$0xff] %vm191, %v189
      %193 = vst.msk [vmem:[#allocation2 + $0x8] sm:$0xff] %vm191, %v190
      %v194 = vld [vmem:[#allocation3] sm:$0xff]
      %v195 = vld [vmem:[#allocation3 + $0x8] sm:$0xff]
      %v196 = vsel %vm165, %v136, 0.0
      %v197 = vsel %vm166, %v141, 0.0
      %v198 = vsel %vm171, %v196, 0.0
      %199 = vadd.xlane.f32.xlu0 %v198
      %v200 = vpop.xlane.xlu0 %199
      %v201 = vsel %vm171, %v197, 0.0
      %202 = vadd.xlane.f32.xlu0 %v201
      %v203 = vpop.xlane.xlu0 %202
      %v204 = vadd.f32 %v194, %v200
      %v205 = vadd.f32 %v195, %v203
      %206 = vst.msk [vmem:[#allocation3] sm:$0xff] %vm191, %v204
      %207 = vst.msk [vmem:[#allocation3 + $0x8] sm:$0xff] %vm191, %v205
    $region25: #{tpu_custom_call.1} parent=1 // pred_fallthru
      _
    %p208 = pneg %p153
    // Predicated region
    $region26: #{tpu_custom_call.1} parent=1 // pred_check
      _
    $region27: #{tpu_custom_call.1} parent=1 // pred_check_branch
      %210 = sbr.rel (%p153) target = $region29
    $region28: #{tpu_custom_call.1} parent=1 // pred_region
      %vm211 = vcmask 130048
      %v212 = vsel %vm211, %v136, -inf
      %v213 = vsel %vm211, %v141, -inf
      %v214 = vmax.f32 %v212, %v213
      %v215 = vrot.slane %v214, 4
      %v216 = vmax.f32 %v214, %v215
      %v217 = vrot.slane %v216, 2
      %v218 = vmax.f32 %v216, %v217
      %v219 = vrot.slane %v218, 1
      %v220 = vmax.f32 %v218, %v219
      %vm221 = vcmask 122880
      %222 = vst.msk [vmem:[#allocation9] sm:$0x1] %vm221, %v220
      %v223 = vld [vmem:[#allocation2] sm:$0xff]
      %v224 = vld [vmem:[#allocation2 + $0x8] sm:$0xff]
      %225 = vmax.xlane.f32.xlu0 %v212
      %v226 = vpop.xlane.xlu0 %225
      %227 = vmax.xlane.f32.xlu0 %v213
      %v228 = vpop.xlane.xlu0 %227
      %v229 = vmax.f32 %v223, %v226
      %v230 = vmax.f32 %v224, %v228
      %vm231 = vcmask 7168
      %232 = vst.msk [vmem:[#allocation2] sm:$0xff] %vm231, %v229
      %233 = vst.msk [vmem:[#allocation2 + $0x8] sm:$0xff] %vm231, %v230
    $region29: #{tpu_custom_call.1} parent=1 // pred_fallthru
      _
    // Predicated region
    $region30: #{tpu_custom_call.1} parent=1 // pred_check
      %p234 = pneg %p43
    $region31: #{tpu_custom_call.1} parent=1 // pred_check_branch
      %236 = sbr.rel (%p234) target = $region33
    $region32: #{tpu_custom_call.1} parent=1 // pred_region
      %v237 = vld [vmem:[#allocation2] sm:$0xff]
      %v238 = vld [vmem:[#allocation2 + $0x8] sm:$0xff]
      %vm239 = vcmask 7168
      %240 = vst.msk [vmem:[%s3] sm:$0xff] %vm239, %v237
      %241 = vst.msk [vmem:[%s3 + $0x8] sm:$0xff] %vm239, %v238
      %v242 = vld [vmem:[#allocation3] sm:$0xff]
      %v243 = vld [vmem:[#allocation3 + $0x8] sm:$0xff]
      %244 = vst.msk [vmem:[%s4] sm:$0xff] %vm239, %v242
      %245 = vst.msk [vmem:[%s4 + $0x8] sm:$0xff] %vm239, %v243
    $region33: #{tpu_custom_call.1} parent=1 // pred_fallthru
      _
    // Predicated region
    $region34: #{tpu_custom_call.1} parent=1 // pred_check
      _
    $region35: #{tpu_custom_call.1} parent=1 // pred_check_branch
      %247 = sbr.rel (0) target = $region37
    $region36: #{tpu_custom_call.1} parent=1 // pred_region
      %s249 = ssub.s32 16, 16
      %250 = vsyncadd [#allocation6], %s249
      %s252 = sshll.u32 [#allocation9], 4
      %s253 = int_to_ptr.vmem [resolvable:$true] %s252
      %255 = dma.vmem_to_hbm [thread:$0]  %s253, 16, %s2, [#allocation6]
    $region37: #{tpu_custom_call.1} parent=1 // pred_fallthru
      _
    // Predicated region
    $region38: #{tpu_custom_call.1} parent=1 // pred_check
      _
    $region39: #{tpu_custom_call.1} parent=1 // pred_check_branch
      %257 = sbr.rel (0) target = $region41
    $region40: #{tpu_custom_call.1} parent=1 // pred_region
      _
    $region41: #{tpu_custom_call.1} parent=1 // pred_fallthru
      _
    // Predicated region
    $region42: #{tpu_custom_call.1} parent=1 // pred_check
      _
    $region43: #{tpu_custom_call.1} parent=1 // pred_check_branch
      %259 = sbr.rel (0) target = $region45
    $region44: #{tpu_custom_call.1} parent=1 // pred_region
      _
    $region45: #{tpu_custom_call.1} parent=1 // pred_fallthru
      _
    // Predicated region
    $region46: #{tpu_custom_call.1} parent=1 // pred_check
      _
    $region47: #{tpu_custom_call.1} parent=1 // pred_check_branch
      %261 = sbr.rel (0) target = $region49
    $region48: #{tpu_custom_call.1} parent=1 // pred_region
      %262 = dma.done [#allocation6], 16
    $region49: #{tpu_custom_call.1} parent=1 // pred_fallthru
      _
    // Predicated region
    $region50: #{tpu_custom_call.1} parent=1 // pred_check
      _
    $region51: #{tpu_custom_call.1} parent=1 // pred_check_branch
      %264 = sbr.rel (0) target = $region53
    $region52: #{tpu_custom_call.1} parent=1 // pred_region
      _
    $region53: #{tpu_custom_call.1} parent=1 // pred_fallthru
      _
    // Predicated region
    $region54: #{tpu_custom_call.1} parent=1 // pred_check
      _
    $region55: #{tpu_custom_call.1} parent=1 // pred_check_branch
      %266 = sbr.rel (0) target = $region57
    $region56: #{tpu_custom_call.1} parent=1 // pred_region
      _
    $region57: #{tpu_custom_call.1} parent=1 // pred_fallthru
      _
    %267 = vsyncpa [#allocation5], 1
    %268 = vsyncpa [#allocation8], 1
    %269 = vsyncpa [#allocation6], 1

</llo_original>
